<compile_context>
chip_gen: v7x
topology: tpu7x:2x2x1
jax: 0.10.0
libtpu: 0.0.40
codegen_flags: <defaults>
</compile_context>

<pallas_src>
import functools

import jax
import jax.numpy as jnp
from jax.experimental import pallas as pl
from jax.experimental.pallas import tpu as pltpu

_BIG = 1e30   # +inf stand-in (distances live in [0, 2], sims in [-1, 1])
_EPS = 1e-6   # F.normalize eps

_VMEM_LIMIT = 48 * 1024 * 1024  # safe on v5e/v6e (128 MiB phys) and v7x (64 MiB phys)


# --------------------------------------------------------------------------- #
# Phase 0: normalize og once + per-row d_ap                                   #
# --------------------------------------------------------------------------- #
def _normalize_kernel(og_ref, ag_ref, ogn_ref, dap_ref):
    eps2 = jnp.float32(_EPS * _EPS)
    og = og_ref[...].astype(jnp.float32)
    ag = ag_ref[...].astype(jnp.float32)
    # F.normalize(x, p=2, dim=1, eps=1e-6) == x * rsqrt(max(||x||^2, eps^2))
    og_n = og * jax.lax.rsqrt(
        jnp.maximum(jnp.sum(og * og, axis=1, keepdims=True), eps2))
    ag_n = ag * jax.lax.rsqrt(
        jnp.maximum(jnp.sum(ag * ag, axis=1, keepdims=True), eps2))
    # Store normalized og in the MXU compute dtype (bf16 when gram_in_bf16):
    # halves column-stream DMA bytes and removes the per-step repack.
    ogn_ref[...] = og_n.astype(ogn_ref.dtype)
    # d_ap is computed in f32 regardless of the gram dtype.
    dap_ref[...] = jnp.clip(
        1.0 - jnp.sum(og_n * ag_n, axis=1, keepdims=True), 0.0, 2.0)


# --------------------------------------------------------------------------- #
# Phase 1: negative mining over the Gram matrix (similarity space)            #
# --------------------------------------------------------------------------- #
def _mining_kernel(nvalid_ref,                       # scalar prefetch: (1,) int32 (SMEM)
                   ogn_r_ref,                        # (T_row, D_pad) normalized og rows
                   ogn_c_ref,                        # (T_col, D_pad) normalized og cols
                   dap_ref,                          # (T_row, 1) f32 anchor-positive dist
                   lbl_r_ref, lbl_c_ref,             # (T_row, 1) / (1, T_col) int32 labels
                   stats_ref,                        # (T_row, 3) out: [d_ap, min_semi, min_hard]
                   msemi_sc, mhard_sc,               # (T_row, 1) f32 running max-sim scratch
                   *, margin, mask_pad_cols):
    j = pl.program_id(1)
    neg_big = jnp.float32(-_BIG)
    big = jnp.float32(_BIG)
    m = jnp.float32(margin)
    T_col = ogn_c_ref.shape[0]

    @pl.when(j == 0)
    def _():
        msemi_sc[...] = jnp.full(msemi_sc.shape, neg_big, jnp.float32)
        mhard_sc[...] = jnp.full(mhard_sc.shape, neg_big, jnp.float32)

    # One MXU pass: NT contraction on the feature (lane) dim — no explicit transpose.
    sim = jax.lax.dot_general(ogn_r_ref[...], ogn_c_ref[...],
                              (((1,), (1,)), ((), ())),
                              preferred_element_type=jnp.float32)   # (T_row, T_col)

    # Identity mask is redundant (labels[i] != labels[i] is always False).
    label_mask = lbl_r_ref[...] != lbl_c_ref[...]                   # (T_row, T_col)

    # Semi-hard window in similarity space:
    #   d_an > d_ap      <=>  sim < 1 - d_ap
    #   d_an < d_ap + m  <=>  sim > 1 - d_ap - m
    d_ap = dap_ref[...]                                             # (T_row, 1)
    sim_hi = 1.0 - d_ap
    sim_lo = sim_hi - m
    in_window = jnp.logical_and(sim < sim_hi, sim > sim_lo)

    if mask_pad_cols:   # static: only emitted when the batch was actually padded
        col_idx = j * T_col + jax.lax.broadcasted_iota(jnp.int32, (1, T_col), 1)
        sim = jnp.where(col_idx < nvalid_ref[0], sim, neg_big)      # padded cols never win

    # Folded masks: the hard select feeds the semi select (one AND + one select removed).
    sim_hard = jnp.where(label_mask, sim, neg_big)
    sim_semi = jnp.where(in_window, sim_hard, neg_big)

    mhard_sc[...] = jnp.maximum(mhard_sc[...],
                                jnp.max(sim_hard, axis=1, keepdims=True))
    msemi_sc[...] = jnp.maximum(msemi_sc[...],
                                jnp.max(sim_semi, axis=1, keepdims=True))

    # Finalize this row tile on the last column block: convert max-sim -> min-dist
    # (monotone), apply the [0,2] clip here, keep BIG as the "no candidate" sentinel.
    @pl.when(j == pl.num_programs(1) - 1)
    def _():
        valid_thr = jnp.float32(-0.5 * _BIG)
        msemi = msemi_sc[...]
        mhard = mhard_sc[...]
        stats_ref[:, 0:1] = d_ap
        stats_ref[:, 1:2] = jnp.where(msemi > valid_thr,
                                      jnp.clip(1.0 - msemi, 0.0, 2.0), big)
        stats_ref[:, 2:3] = jnp.where(mhard > valid_thr,
                                      jnp.clip(1.0 - mhard, 0.0, 2.0), big)


# --------------------------------------------------------------------------- #
# Phase 2: per-row stats -> scalar loss (branchless fallback + reduce)        #
# --------------------------------------------------------------------------- #
def _reduce_kernel(nvalid_ref, stats_ref, out_ref, *, margin, reducers):
    stats = stats_ref[...]                         # (B_pad, 3) f32
    d_ap = stats[:, 0:1]
    min_semi = stats[:, 1:2]
    min_hard = stats[:, 2:3]
    Bp = stats.shape[0]
    m = jnp.float32(margin)
    thr = jnp.float32(0.5 * _BIG)

    row_idx = jax.lax.broadcasted_iota(jnp.int32, (Bp, 1), 0)
    row_valid = row_idx < nvalid_ref[0]            # mask padded rows

    def _reduce(min_d, valid):
        vf = valid.astype(jnp.float32)
        terms = jnp.maximum(d_ap - min_d + m, 0.0) * vf
        s = jnp.sum(terms, keepdims=True)          # (1, 1)
        cnt = jnp.sum(vf, keepdims=True)           # (1, 1)
        if reducers == 'mean':
            # Exact division (runs once) — approx reciprocal removed per review.
            s = s / (cnt + jnp.float32(1e-7))
        return s, cnt

    valid_semi = jnp.logical_and(min_semi < thr, row_valid)
    valid_hard = jnp.logical_and(min_hard < thr, row_valid)
    loss_semi, cnt_semi = _reduce(min_semi, valid_semi)
    loss_hard, cnt_hard = _reduce(min_hard, valid_hard)

    # branchless: semi-hard if any exist, else hard negatives, else 0
    loss = jnp.where(cnt_semi > 0.0, loss_semi,
                     jnp.where(cnt_hard > 0.0, loss_hard, jnp.float32(0.0)))
    out_ref[...] = loss


# --------------------------------------------------------------------------- #
# Wrapper                                                                     #
# --------------------------------------------------------------------------- #
def _round_up(x, mult):
    return (x + mult - 1) // mult * mult


def sentence_triplet_loss(og_feat, ag_feat, labels, margin=0.5,
                          reducers='mean', gram_in_bf16=True):
    assert reducers in ('mean', 'sum')
    B, D = og_feat.shape

    # Tile selection:
    #   * column (lane/N) tile fixed at 128: lane-native and safe on v5e
    #     (widen to 256 on v6e/v7x if sweeping).
    #   * row tile grows to 256 for large B (amortizes ~0.35 us/step overhead and
    #     cuts the B^2*D/T_row column re-stream) while keeping >=2 row tiles so
    #     v7x megacore can shard the "parallel" axis.
    if B <= 128:
        T_row = T_col = _round_up(B, 8)
    elif B <= 512:
        T_row = T_col = 128
    else:
        T_row, T_col = 256, 128
    B_pad = _round_up(B, max(T_row, T_col))
    D_pad = _round_up(D, 128)     # keep the MXU contraction dim lane-aligned

    lbl = labels.reshape(-1).astype(jnp.int32)
    if D_pad != D:
        og_feat = jnp.pad(og_feat, ((0, 0), (0, D_pad - D)))
        ag_feat = jnp.pad(ag_feat, ((0, 0), (0, D_pad - D)))
    if B_pad != B:
        og_feat = jnp.pad(og_feat, ((0, B_pad - B), (0, 0)))
        ag_feat = jnp.pad(ag_feat, ((0, B_pad - B), (0, 0)))
        lbl = jnp.pad(lbl, (0, B_pad - B), constant_values=-1)

    n_valid = jnp.array([B], dtype=jnp.int32)
    lbl_rows = lbl.reshape(B_pad, 1)
    lbl_cols = lbl.reshape(1, B_pad)
    compute_dtype = jnp.bfloat16 if gram_in_bf16 else jnp.float32

    # ---- Phase 0: normalize og once (bf16 storage on the fast path) + d_ap ----
    ogn, dap = pl.pallas_call(
        _normalize_kernel,
        out_shape=(jax.ShapeDtypeStruct((B_pad, D_pad), compute_dtype),
                   jax.ShapeDtypeStruct((B_pad, 1), jnp.float32)),
        grid_spec=pltpu.PrefetchScalarGridSpec(
            num_scalar_prefetch=0,
            grid=(B_pad // T_row,),
            in_specs=[pl.BlockSpec((T_row, D_pad), lambda i: (i, 0)),
                      pl.BlockSpec((T_row, D_pad), lambda i: (i, 0))],
            out_specs=(pl.BlockSpec((T_row, D_pad), lambda i: (i, 0)),
                       pl.BlockSpec((T_row, 1), lambda i: (i, 0))),
        ),
        compiler_params=pltpu.CompilerParams(
            dimension_semantics=("parallel",),
            vmem_limit_bytes=_VMEM_LIMIT),
    )(og_feat, ag_feat)

    # ---- Phase 1: mining over (row_tile, col_tile) of the Gram matrix ----
    grid = (B_pad // T_row, B_pad // T_col)
    stats = pl.pallas_call(
        functools.partial(_mining_kernel, margin=margin,
                          mask_pad_cols=(B_pad != B)),
        out_shape=jax.ShapeDtypeStruct((B_pad, 3), jnp.float32),
        grid_spec=pltpu.PrefetchScalarGridSpec(
            num_scalar_prefetch=1,
            grid=grid,
            in_specs=[
                pl.BlockSpec((T_row, D_pad), lambda i, j, nv: (i, 0)),   # og_n rows (resident over j)
                pl.BlockSpec((T_col, D_pad), lambda i, j, nv: (j, 0)),   # og_n cols (streamed)
                pl.BlockSpec((T_row, 1), lambda i, j, nv: (i, 0)),       # d_ap
                pl.BlockSpec((T_row, 1), lambda i, j, nv: (i, 0)),       # row labels
                pl.BlockSpec((1, T_col), lambda i, j, nv: (0, j)),       # col labels
            ],
            out_specs=pl.BlockSpec((T_row, 3), lambda i, j, nv: (i, 0)),
            scratch_shapes=[pltpu.VMEM((T_row, 1), jnp.float32),   # running max-sim (semi)
                            pltpu.VMEM((T_row, 1), jnp.float32)],  # running max-sim (hard)
        ),
        compiler_params=pltpu.CompilerParams(
            dimension_semantics=("parallel", "arbitrary"),
            vmem_limit_bytes=_VMEM_LIMIT),
    )(n_valid, ogn, ogn, dap, lbl_rows, lbl_cols)

    # ---- Phase 2: tiny epilogue kernel -> scalar loss ----
    loss = pl.pallas_call(
        functools.partial(_reduce_kernel, margin=margin, reducers=reducers),
        out_shape=jax.ShapeDtypeStruct((1, 1), jnp.float32),
        in_specs=[
            pl.BlockSpec(memory_space=pltpu.MemorySpace.SMEM),
            pl.BlockSpec(memory_space=pltpu.MemorySpace.VMEM),
        ],
        out_specs=pl.BlockSpec(memory_space=pltpu.MemorySpace.VMEM),
    )(n_valid, stats)
    return loss[0, 0]


# --------------------------------------------------------------------------- #
# Pure-JAX reference (eager) of the PyTorch forward                           #
# --------------------------------------------------------------------------- #
def _reference_loss(og, ag, labels, margin=0.5, reducers='mean'):
    og = jnp.asarray(og, jnp.float32)
    ag = jnp.asarray(ag, jnp.float32)
    B = og.shape[0]

    def normalize(x):
        return x / jnp.maximum(jnp.linalg.norm(x, axis=1, keepdims=True), 1e-6)

    def cos_dist(x, y):
        return jnp.clip(1.0 - normalize(x) @ normalize(y).T, 0.0, 2.0)

    d_ap = jnp.diag(cos_dist(og, ag))
    d_an = cos_dist(og, og)
    labels = labels.reshape(-1)
    label_mask = labels[None, :] != labels[:, None]
    eye_mask = ~jnp.eye(B, dtype=bool)
    valid_neg = label_mask & eye_mask
    d_ap_e = d_ap[:, None]
    semi = (d_an > d_ap_e) & (d_an < d_ap_e + margin) & valid_neg
    min_semi = jnp.min(jnp.where(semi, d_an, jnp.inf), axis=1)
    valid_semi = min_semi < jnp.inf
    if not bool(jnp.any(valid_semi)):
        min_hard = jnp.min(jnp.where(valid_neg, d_an, jnp.inf), axis=1)
        valid_hard = min_hard < jnp.inf
        if not bool(jnp.any(valid_hard)):
            return jnp.float32(0.0)
        terms = jax.nn.relu(d_ap[valid_hard] - min_hard[valid_hard] + margin)
        return terms.sum() / (valid_hard.sum() + 1e-7) if reducers == 'mean' \
            else terms.sum()
    terms = jax.nn.relu(d_ap[valid_semi] - min_semi[valid_semi] + margin)
    return terms.sum() / (valid_semi.sum() + 1e-7) if reducers == 'mean' \
        else terms.sum()


if __name__ == "__main__":
    key = jax.random.PRNGKey(0)
    k1, k2, k3, k4 = jax.random.split(key, 4)

    # 1) Small demo (single tile), f32 gram path vs reference (strict).
    B, D = 8, 32
    og_feat = jax.random.normal(k1, (B, D), dtype=jnp.float32)
    ag_feat = og_feat + 0.1 * jax.random.normal(k2, (B, D), dtype=jnp.float32)
    labels = jnp.array([0, 0, 1, 1, 2, 2, 3, 3], dtype=jnp.int32)
    loss = jax.block_until_ready(
        sentence_triplet_loss(og_feat, ag_feat, labels, 0.5, 'mean',
                              gram_in_bf16=False))
    ref = _reference_loss(og_feat, ag_feat, labels, 0.5, 'mean')
    assert jnp.allclose(loss, ref, rtol=1e-3, atol=1e-3), (loss, ref)

    # 2) Multi-tile path with row/col/D padding (B=200 -> 256, D=64 -> 128), f32 gram.
    B2, D2 = 200, 64
    og2 = jax.random.normal(k3, (B2, D2), dtype=jnp.float32)
    ag2 = og2 + 0.05 * jax.random.normal(k1, (B2, D2), dtype=jnp.float32)
    lbl2 = jnp.arange(B2, dtype=jnp.int32) % 10
    for red in ('mean', 'sum'):
        loss2 = jax.block_until_ready(
            sentence_triplet_loss(og2, ag2, lbl2, 0.5, red, gram_in_bf16=False))
        ref2 = _reference_loss(og2, ag2, lbl2, 0.5, red)
        assert jnp.allclose(loss2, ref2, rtol=1e-3, atol=1e-3), (red, loss2, ref2)

    # 3) Default bf16 MXU gram path: the selected negative may flip for near-ties,
    #    so only a loose / finiteness check here.
    loss_bf16 = jax.block_until_ready(
        sentence_triplet_loss(og2, ag2, lbl2, 0.5, 'mean'))
    assert bool(jnp.isfinite(loss_bf16))
    assert jnp.allclose(loss_bf16, _reference_loss(og2, ag2, lbl2, 0.5, 'mean'),
                        rtol=5e-2, atol=5e-2)

    # 4) No semi-hard negatives -> hard-negative fallback branch (d_ap == 2).
    B3, D3 = 12, 40
    og3 = jax.random.normal(k4, (B3, D3), dtype=jnp.float32)
    ag3 = -og3
    lbl3 = jnp.arange(B3, dtype=jnp.int32) % 4
    loss3 = jax.block_until_ready(
        sentence_triplet_loss(og3, ag3, lbl3, 0.5, 'mean', gram_in_bf16=False))
    ref3 = _reference_loss(og3, ag3, lbl3, 0.5, 'mean')
    assert jnp.allclose(loss3, ref3, rtol=1e-3, atol=1e-3), (loss3, ref3)

    # 5) No valid negatives at all (all labels equal) -> loss 0.
    lbl_same = jnp.zeros((B,), dtype=jnp.int32)
    loss0 = jax.block_until_ready(
        sentence_triplet_loss(og_feat, ag_feat, lbl_same, 0.5, 'mean',
                              gram_in_bf16=False))
    assert jnp.allclose(loss0, 0.0, atol=1e-6), loss0

    print("KERNEL_OK")
</pallas_src>

<mosaic_0001>
module attributes {stable_mosaic.version = 11 : i64} {
  func.func @_normalize_kernel(%arg0: i32, %arg1: memref<8x128xf32, #tpu.memory_space<vmem>>, %arg2: memref<8x128xf32, #tpu.memory_space<vmem>>, %arg3: memref<8x128xf32, #tpu.memory_space<vmem>>, %arg4: memref<8x1xf32, #tpu.memory_space<vmem>>) attributes {dimension_semantics = [#tpu.dimension_semantics<parallel>], iteration_bounds = array<i64: 1>, scalar_prefetch = 0 : i64, scratch_operands = 0 : i64, tpu.core_type = #tpu.core_type<tc>, window_params = [{transform_indices = @transform_0, window_bounds = array<i64: 8, 128>}, {transform_indices = @transform_1, window_bounds = array<i64: 8, 128>}, {transform_indices = @transform_2, window_bounds = array<i64: 8, 128>}, {transform_indices = @transform_3, window_bounds = array<i64: 8, 1>}]} {
    %c0 = arith.constant 0 : index
    %c0_0 = arith.constant 0 : index
    %0 = vector.load %arg1[%c0, %c0_0] : memref<8x128xf32, #tpu.memory_space<vmem>>, vector<8x128xf32>
    %c0_1 = arith.constant 0 : index
    %c0_2 = arith.constant 0 : index
    %1 = vector.load %arg2[%c0_1, %c0_2] : memref<8x128xf32, #tpu.memory_space<vmem>>, vector<8x128xf32>
    %2 = arith.mulf %0, %0 : vector<8x128xf32>
    %cst = arith.constant dense<0.000000e+00> : vector<8xf32>
    %3 = vector.multi_reduction <add>, %2, %cst [1] : vector<8x128xf32> to vector<8xf32>
    %4 = vector.shape_cast %3 : vector<8xf32> to vector<8x1xf32>
    %cst_3 = arith.constant 9.99999996E-13 : f32
    %5 = vector.broadcast %cst_3 : f32 to vector<8x1xf32>
    %6 = arith.maximumf %4, %5 : vector<8x1xf32>
    %7 = math.rsqrt %6 : vector<8x1xf32>
    %8 = vector.broadcast %7 : vector<8x1xf32> to vector<8x128xf32>
    %9 = arith.mulf %0, %8 : vector<8x128xf32>
    %10 = arith.mulf %1, %1 : vector<8x128xf32>
    %cst_4 = arith.constant dense<0.000000e+00> : vector<8xf32>
    %11 = vector.multi_reduction <add>, %10, %cst_4 [1] : vector<8x128xf32> to vector<8xf32>
    %12 = vector.shape_cast %11 : vector<8xf32> to vector<8x1xf32>
    %cst_5 = arith.constant 9.99999996E-13 : f32
    %13 = vector.broadcast %cst_5 : f32 to vector<8x1xf32>
    %14 = arith.maximumf %12, %13 : vector<8x1xf32>
    %15 = math.rsqrt %14 : vector<8x1xf32>
    %16 = vector.broadcast %15 : vector<8x1xf32> to vector<8x128xf32>
    %17 = arith.mulf %1, %16 : vector<8x128xf32>
    %c0_6 = arith.constant 0 : index
    %c0_7 = arith.constant 0 : index
    %18 = vector.load %arg3[%c0_6, %c0_7] : memref<8x128xf32, #tpu.memory_space<vmem>>, vector<8x128xf32>
    tpu.vector_store %arg3[%c0_6, %c0_7], %9 {strides = array<i32>} : memref<8x128xf32, #tpu.memory_space<vmem>>, vector<8x128xf32>,
    %19 = arith.mulf %9, %17 : vector<8x128xf32>
    %cst_8 = arith.constant dense<0.000000e+00> : vector<8xf32>
    %20 = vector.multi_reduction <add>, %19, %cst_8 [1] : vector<8x128xf32> to vector<8xf32>
    %21 = vector.shape_cast %20 : vector<8xf32> to vector<8x1xf32>
    %cst_9 = arith.constant 1.000000e+00 : f32
    %22 = vector.broadcast %cst_9 : f32 to vector<8x1xf32>
    %23 = arith.subf %22, %21 : vector<8x1xf32>
    %cst_10 = arith.constant 0.000000e+00 : f32
    %cst_11 = arith.constant 2.000000e+00 : f32
    %24 = vector.broadcast %cst_10 : f32 to vector<8x1xf32>
    %25 = arith.maximumf %24, %23 : vector<8x1xf32>
    %26 = vector.broadcast %cst_11 : f32 to vector<8x1xf32>
    %27 = arith.minimumf %26, %25 : vector<8x1xf32>
    %c0_12 = arith.constant 0 : index
    %c0_13 = arith.constant 0 : index
    %28 = vector.load %arg4[%c0_12, %c0_13] : memref<8x1xf32, #tpu.memory_space<vmem>>, vector<8x1xf32>
    tpu.vector_store %arg4[%c0_12, %c0_13], %27 {strides = array<i32>} : memref<8x1xf32, #tpu.memory_space<vmem>>, vector<8x1xf32>,
    return
  }
  func.func @transform_0(%arg0: i32) -> (i32, i32) {
    %c0_i32 = arith.constant 0 : i32
    %c0_i32_0 = arith.constant 0 : i32
    return %arg0, %c0_i32 : i32, i32
  }
  func.func @transform_1(%arg0: i32) -> (i32, i32) {
    %c0_i32 = arith.constant 0 : i32
    %c0_i32_0 = arith.constant 0 : i32
    return %arg0, %c0_i32 : i32, i32
  }
  func.func @transform_2(%arg0: i32) -> (i32, i32) {
    %c0_i32 = arith.constant 0 : i32
    %c0_i32_0 = arith.constant 0 : i32
    return %arg0, %c0_i32 : i32, i32
  }
  func.func @transform_3(%arg0: i32) -> (i32, i32) {
    %c0_i32 = arith.constant 0 : i32
    %c0_i32_0 = arith.constant 0 : i32
    return %arg0, %c0_i32 : i32, i32
  }
}

</mosaic_0001>

<llo_original>
// kernel: tpu_custom_call.1
$region0: #{tpu_custom_call.1}
  #allocation0 [shape = 'u32[]', space=smem, size = 0x4, offset = 0x4, fixed_abs, tag = 'smem constant byte address 0x4 - core index']
  #allocation1 [shape = 'u32[144,128]{1,0:T(1,128)}', space=vmem, size = 0x12000, scoped, tag = 'internal scratch']
  %s0 = inlined_call_operand.hbm [shape: f32[8,128], index: 0, kind: input, shape index: {}]
  %s1 = inlined_call_operand.hbm [shape: f32[8,128], index: 1, kind: input, shape index: {}]
  %s2 = inlined_call_operand.hbm [shape: f32[8,128], index: 2, kind: output, shape index: {0}]
  %s3 = inlined_call_operand.vmem [shape: f32[8,1], index: 3, kind: output, shape index: {1}]
  %4 = xla_tuple %s2, %s3
  %s5 = sld [smem:[#allocation0]]
  $region34: #{tpu_custom_call.1} parent=0
    _
  %s7 = ssub.s32 1, %s5
  %s8 = scalar_select 0, %s7, %s5
  $region1: #{tpu_custom_call.1} parent=0
    #allocation2 [shape = 'u8[4096]{0}', space=vmem, size = 0x1000, scoped, tag = 'input window, operand 0, single buffered']
    #allocation3 [shape = 's32[1]{0}', space=sflag, size = 0x4, scoped, tag = 'scoped memory for tpu_custom_call.1']
    #allocation4 [shape = 's32[1]{0}', space=sflag, size = 0x4, scoped, tag = 'scoped memory for tpu_custom_call.1']
    #allocation5 [shape = 'u8[4096]{0}', space=vmem, size = 0x1000, scoped, tag = 'input window, operand 1, single buffered']
    #allocation6 [shape = 's32[1]{0}', space=sflag, size = 0x4, scoped, tag = 'scoped memory for tpu_custom_call.1']
    #allocation7 [shape = 'u8[4096]{0}', space=vmem, size = 0x1000, scoped, tag = 'output window, operand 0, single buffered']
    %9 = vsyncpa [#allocation3], 0
    %10 = vsyncpa [#allocation6], 0
    %11 = vsyncpa [#allocation4], 0
    // Predicated region
    $region2: #{tpu_custom_call.1} parent=1 // pred_check
      _
    $region3: #{tpu_custom_call.1} parent=1 // pred_check_branch
      %13 = sbr.rel (0) target = $region5
    $region4: #{tpu_custom_call.1} parent=1 // pred_region
      %s15 = ssub.s32 128, 128
      %16 = vsyncadd [#allocation3], %s15
      %s18 = sshll.u32 [#allocation2], 4
      %s19 = int_to_ptr.vmem [resolvable:$true] %s18
      %21 = dma.hbm_to_vmem [thread:$0]  %s0, 128, %s19, [#allocation3]
    $region5: #{tpu_custom_call.1} parent=1 // pred_fallthru
      _
    // Predicated region
    $region6: #{tpu_custom_call.1} parent=1 // pred_check
      _
    $region7: #{tpu_custom_call.1} parent=1 // pred_check_branch
      %23 = sbr.rel (0) target = $region9
    $region8: #{tpu_custom_call.1} parent=1 // pred_region
      %s25 = ssub.s32 128, 128
      %26 = vsyncadd [#allocation6], %s25
      %s28 = sshll.u32 [#allocation5], 4
      %s29 = int_to_ptr.vmem [resolvable:$true] %s28
      %31 = dma.hbm_to_vmem [thread:$0]  %s1, 128, %s29, [#allocation6]
    $region9: #{tpu_custom_call.1} parent=1 // pred_fallthru
      _
    // Predicated region
    $region10: #{tpu_custom_call.1} parent=1 // pred_check
      _
    $region11: #{tpu_custom_call.1} parent=1 // pred_check_branch
      %33 = sbr.rel (0) target = $region13
    $region12: #{tpu_custom_call.1} parent=1 // pred_region
      %34 = dma.done [#allocation3], 128
    $region13: #{tpu_custom_call.1} parent=1 // pred_fallthru
      _
    // Predicated region
    $region14: #{tpu_custom_call.1} parent=1 // pred_check
      _
    $region15: #{tpu_custom_call.1} parent=1 // pred_check_branch
      %36 = sbr.rel (0) target = $region17
    $region16: #{tpu_custom_call.1} parent=1 // pred_region
      %37 = dma.done [#allocation6], 128
    $region17: #{tpu_custom_call.1} parent=1 // pred_fallthru
      _
    %v38 = vld [vmem:[#allocation2] sm:$0xff]
    %v39 = vld [vmem:[#allocation5] sm:$0xff]
    %v40 = vmul.f32 %v38, %v38
    %41 = vadd.xlane.f32.xlu0 %v40
    %v42 = vpop.xlane.xlu0 %41
    %v43 = vmax.f32 %v42, 1e-12
    %v44 = vrsqrt.pop %v43
    %v45 = vmul.f32 %v38, %v44
    %v46 = vmul.f32 %v39, %v39
    %47 = vadd.xlane.f32.xlu0 %v46
    %v48 = vpop.xlane.xlu0 %47
    %v49 = vmax.f32 %v48, 1e-12
    %v50 = vrsqrt.pop %v49
    %v51 = vmul.f32 %v39, %v50
    %52 = vst [vmem:[#allocation7] sm:$0xff] %v45
    %v53 = vmul.f32 %v45, %v51
    %54 = vadd.xlane.f32.xlu0 %v53
    %v55 = vpop.xlane.xlu0 %54
    %v56 = vsub.f32 1.0, %v55
    %v57 = vmax.f32 %v56, 0.0
    %v58 = vmin.f32 %v57, 2.0
    %vm59 = vcmask 7168
    %60 = vst.msk [vmem:[%s3] sm:$0xff] %vm59, %v58
    // Predicated region
    $region18: #{tpu_custom_call.1} parent=1 // pred_check
      _
    $region19: #{tpu_custom_call.1} parent=1 // pred_check_branch
      %62 = sbr.rel (0) target = $region21
    $region20: #{tpu_custom_call.1} parent=1 // pred_region
      %s64 = ssub.s32 128, 128
      %65 = vsyncadd [#allocation4], %s64
      %s67 = sshll.u32 [#allocation7], 4
      %s68 = int_to_ptr.vmem [resolvable:$true] %s67
      %70 = dma.vmem_to_hbm [thread:$0]  %s68, 128, %s2, [#allocation4]
    $region21: #{tpu_custom_call.1} parent=1 // pred_fallthru
      _
    // Predicated region
    $region22: #{tpu_custom_call.1} parent=1 // pred_check
      _
    $region23: #{tpu_custom_call.1} parent=1 // pred_check_branch
      %72 = sbr.rel (0) target = $region25
    $region24: #{tpu_custom_call.1} parent=1 // pred_region
      _
    $region25: #{tpu_custom_call.1} parent=1 // pred_fallthru
      _
    // Predicated region
    $region26: #{tpu_custom_call.1} parent=1 // pred_check
      _
    $region27: #{tpu_custom_call.1} parent=1 // pred_check_branch
      %74 = sbr.rel (0) target = $region29
    $region28: #{tpu_custom_call.1} parent=1 // pred_region
      %75 = dma.done [#allocation4], 128
    $region29: #{tpu_custom_call.1} parent=1 // pred_fallthru
      _
    // Predicated region
    $region30: #{tpu_custom_call.1} parent=1 // pred_check
      _
    $region31: #{tpu_custom_call.1} parent=1 // pred_check_branch
      %77 = sbr.rel (0) target = $region33
    $region32: #{tpu_custom_call.1} parent=1 // pred_region
      _
    $region33: #{tpu_custom_call.1} parent=1 // pred_fallthru
      _
    %78 = vsyncpa [#allocation3], 1
    %79 = vsyncpa [#allocation6], 1
    %80 = vsyncpa [#allocation4], 1

</llo_original>
